<compile_context>
chip_gen: v6e
topology: v6e:2x2x1
jax: 0.10.0
libtpu: 0.0.40
codegen_flags: <defaults>
</compile_context>

<pallas_src>
import numpy as np
import jax
import jax.numpy as jnp
from jax.experimental import pallas as pl
from jax.experimental.pallas import tpu as pltpu


# ----------------------------------------------------------------------------
# Kernel
# ----------------------------------------------------------------------------
def _permute_scale_kernel(x_ref, o_ref):
    # uint8 -> f32 cast and 1/255 scale fused in-kernel (HBM read is 1 B/elem).
    # Cast through int32 (zero-extend) then f32 — robust Mosaic lowering path.
    x_f32 = x_ref[...].astype(jnp.int32).astype(jnp.float32)
    # Constant-reciprocal multiply: single VPU vmul, keeps the EUP slot free.
    o_ref[...] = x_f32 * jnp.float32(1.0 / 255.0)


# ----------------------------------------------------------------------------
# Tiling helpers
# ----------------------------------------------------------------------------
def _choose_2d_layout(B, C, D, H, W):
    """Pick a (rows, lanes) flattening of the NCDHW tensor with a lane-dense,
    128-aligned last dim when possible (unmasked vst); otherwise fall back to
    (B*C*D, H*W), which is still legal via the full-array-dim exception."""
    for rows, lanes in ((B * C, D * H * W), (B * C * D, H * W), (B * C * D * H, W)):
        if lanes % 128 == 0 and lanes <= 65536:
            return rows, lanes
    return B * C * D, H * W


def _choose_row_tile(rows, lanes, vmem_budget_bytes=8 << 20):
    """Largest row tile whose double-buffered tiles (uint8 in = 1 B/elem +
    f32 out = 4 B/elem) stay well under the scoped-VMEM default on all of
    v5e / v6e / v7x (so no vmem_limit override is needed)."""
    max_tile = max(8, vmem_budget_bytes // (2 * (1 + 4) * lanes))
    # Multiple of 32: uint8 packs 32 rows per vreg sublane group (full-vreg vld).
    max_tile = max(32 * (max_tile // 32), 8)
    if rows <= max_tile:
        # Small input fits in one / two blocks.  If it is big enough, split in
        # two so both v7x TensorCores get work on the "parallel" grid axis.
        if rows >= 64 and rows % 16 == 0:
            return rows // 2
        return rows  # single full-rows block (legal: block dim == full array dim)
    return max_tile


# ----------------------------------------------------------------------------
# Wrappers
# ----------------------------------------------------------------------------
def input_permute(x_ndhwc):
    """Equivalent of Policy.input_permute: x.permute(0, 4, 1, 2, 3) / 255.0."""
    B, D, H, W, C = x_ndhwc.shape

    # Layout plumbing on the *uint8* tensor (1 B/elem round trip, not 4 B):
    # NDHWC -> NCDHW, then flatten to a lane-dense 2-D slab.
    # TODO(synk): with C not a multiple of 128 the permute cannot be expressed
    # as a legal BlockSpec index_map, so it stays an XLA uint8 transpose.
    x_ncdhw = jnp.transpose(x_ndhwc, (0, 4, 1, 2, 3))
    rows, lanes = _choose_2d_layout(B, C, D, H, W)
    x2d = x_ncdhw.reshape(rows, lanes)

    tile_r = _choose_row_tile(rows, lanes)
    grid = (pl.cdiv(rows, tile_r),)

    out2d = pl.pallas_call(
        _permute_scale_kernel,
        out_shape=jax.ShapeDtypeStruct((rows, lanes), jnp.float32),
        grid_spec=pltpu.PrefetchScalarGridSpec(
            num_scalar_prefetch=0,
            grid=grid,
            in_specs=[pl.BlockSpec((tile_r, lanes), lambda i: (i, 0))],
            out_specs=pl.BlockSpec((tile_r, lanes), lambda i: (i, 0)),
        ),
        compiler_params=pltpu.CompilerParams(
            dimension_semantics=("parallel",),
        ),
    )(x2d)

    return out2d.reshape(B, C, D, H, W)


def get_value(batch_size):
    """Policy.get_value: zeros(B, 1).  A dedicated Pallas launch for a
    lane-sparse (B, 1) fill costs more than it saves, so plain jnp.zeros."""
    return jnp.zeros((batch_size, 1), jnp.float32)


def get_loss(batch_size):
    """Policy.get_loss: (zeros(B,1), zeros(B,1), zeros(1))."""
    values = jnp.zeros((batch_size, 1), jnp.float32)
    action_log_probs = jnp.zeros((batch_size, 1), jnp.float32)
    dist_entropy = jnp.zeros((1,), jnp.float32)
    return values, action_log_probs, dist_entropy


def get_action(key, batch_size, num_actions=4):
    # TODO(synk): act_space.sample() is environment-dependent (gym); emulate a
    # discrete action space with jax.random on the host side.
    action = jax.random.randint(key, (batch_size,), 0, num_actions)
    return np.asarray(action).squeeze(), {}


# ----------------------------------------------------------------------------
# Main
# ----------------------------------------------------------------------------
if __name__ == "__main__":
    key = jax.random.PRNGKey(0)
    k_img, k_act = jax.random.split(key)

    # Small NDHWC observation stack: batch=2, depth(frames)=4, H=8, W=16, C=3
    B, D, H, W, C = 2, 4, 8, 16, 3
    x = jax.random.randint(k_img, (B, D, H, W, C), 0, 256, dtype=jnp.int32).astype(
        jnp.uint8
    )

    # input_permute via Pallas kernel (uint8 in, cast + scale fused in-kernel)
    y = jax.block_until_ready(input_permute(x))

    # reference check (plain JAX)
    ref = jnp.transpose(x, (0, 4, 1, 2, 3)).astype(jnp.float32) / 255.0
    assert y.shape == (B, C, D, H, W)
    np.testing.assert_allclose(np.asarray(y), np.asarray(ref), rtol=1e-6, atol=1e-6)

    # get_value / get_loss zero outputs
    values = jax.block_until_ready(get_value(B))
    v2, log_probs, entropy = get_loss(B)
    v2 = jax.block_until_ready(v2)
    log_probs = jax.block_until_ready(log_probs)
    entropy = jax.block_until_ready(entropy)
    assert values.shape == (B, 1) and float(jnp.abs(values).sum()) == 0.0
    assert v2.shape == (B, 1) and float(jnp.abs(v2).sum()) == 0.0
    assert log_probs.shape == (B, 1) and float(jnp.abs(log_probs).sum()) == 0.0
    assert entropy.shape == (1,) and float(jnp.abs(entropy).sum()) == 0.0

    # get_action (random policy, host-side sampling)
    action, info_p = get_action(k_act, B)
    assert action.shape == (B,)

    print("KERNEL_OK")
</pallas_src>

<mosaic_0001>
module attributes {stable_mosaic.version = 11 : i64} {
  func.func @_permute_scale_kernel(%arg0: i32, %arg1: memref<6x512xi8, #tpu.memory_space<vmem>>, %arg2: memref<6x512xf32, #tpu.memory_space<vmem>>) attributes {dimension_semantics = [#tpu.dimension_semantics<parallel>], iteration_bounds = array<i64: 1>, scalar_prefetch = 0 : i64, scratch_operands = 0 : i64, tpu.core_type = #tpu.core_type<tc>, window_params = [{transform_indices = @transform_0, window_bounds = array<i64: 6, 512>}, {transform_indices = @transform_1, window_bounds = array<i64: 6, 512>}]} {
    %c0 = arith.constant 0 : index
    %c0_0 = arith.constant 0 : index
    %0 = vector.load %arg1[%c0, %c0_0] : memref<6x512xi8, #tpu.memory_space<vmem>>, vector<6x512xi8>
    %1 = arith.extui %0 : vector<6x512xi8> to vector<6x512xi32>
    %2 = arith.sitofp %1 : vector<6x512xi32> to vector<6x512xf32>
    %cst = arith.constant 0.00392156886 : f32
    %3 = vector.broadcast %cst : f32 to vector<6x512xf32>
    %4 = arith.mulf %2, %3 : vector<6x512xf32>
    %c0_1 = arith.constant 0 : index
    %c0_2 = arith.constant 0 : index
    %5 = vector.load %arg2[%c0_1, %c0_2] : memref<6x512xf32, #tpu.memory_space<vmem>>, vector<6x512xf32>
    tpu.vector_store %arg2[%c0_1, %c0_2], %4 {strides = array<i32>} : memref<6x512xf32, #tpu.memory_space<vmem>>, vector<6x512xf32>,
    return
  }
  func.func @transform_0(%arg0: i32) -> (i32, i32) {
    %c0_i32 = arith.constant 0 : i32
    %c0_i32_0 = arith.constant 0 : i32
    return %arg0, %c0_i32 : i32, i32
  }
  func.func @transform_1(%arg0: i32) -> (i32, i32) {
    %c0_i32 = arith.constant 0 : i32
    %c0_i32_0 = arith.constant 0 : i32
    return %arg0, %c0_i32 : i32, i32
  }
}

</mosaic_0001>

<llo_original>
// kernel: tpu_custom_call.1
$region0: #{tpu_custom_call.1}
  #allocation0 [shape = 'u32[]', space=smem, size = 0x4, offset = 0x4, fixed_abs, tag = 'smem constant byte address 0x4 - core index']
  #allocation1 [shape = 'u32[144,128]{1,0:T(1,128)}', space=vmem, size = 0x12000, scoped, tag = 'internal scratch']
  %s0 = inlined_call_operand.hbm [shape: u8[6,512], index: 0, kind: input, shape index: {}]
  %s1 = inlined_call_operand.hbm [shape: f32[6,512], index: 1, kind: output, shape index: {}]
  %s2 = sld [smem:[#allocation0]]
  $region18: #{tpu_custom_call.1} parent=0
    _
  %s4 = ssub.s32 1, %s2
  %s5 = scalar_select 0, %s4, %s2
  $region1: #{tpu_custom_call.1} parent=0
    #allocation2 [shape = 'u8[4096]{0}', space=vmem, size = 0x1000, scoped, tag = 'input window, operand 0, single buffered']
    #allocation3 [shape = 's32[1]{0}', space=sflag, size = 0x4, scoped, tag = 'scoped memory for tpu_custom_call.1']
    #allocation4 [shape = 's32[1]{0}', space=sflag, size = 0x4, scoped, tag = 'scoped memory for tpu_custom_call.1']
    #allocation5 [shape = 'u8[16384]{0}', space=vmem, size = 0x4000, scoped, tag = 'output window, operand 0, single buffered']
    %6 = vsyncpa [#allocation3], 0
    %7 = vsyncpa [#allocation4], 0
    // Predicated region
    $region2: #{tpu_custom_call.1} parent=1 // pred_check
      _
    $region3: #{tpu_custom_call.1} parent=1 // pred_check_branch
      %9 = sbr.rel (0) target = $region5
    $region4: #{tpu_custom_call.1} parent=1 // pred_region
      %s11 = ssub.s32 128, 128
      %12 = vsyncadd [#allocation3], %s11
      %s14 = sshll.u32 [#allocation2], 4
      %s15 = int_to_ptr.vmem [resolvable:$true] %s14
      %17 = dma.hbm_to_vmem [thread:$0]  %s0, 128, %s15, [#allocation3]
    $region5: #{tpu_custom_call.1} parent=1 // pred_fallthru
      _
    // Predicated region
    $region6: #{tpu_custom_call.1} parent=1 // pred_check
      _
    $region7: #{tpu_custom_call.1} parent=1 // pred_check_branch
      %19 = sbr.rel (0) target = $region9
    $region8: #{tpu_custom_call.1} parent=1 // pred_region
      %20 = dma.done [#allocation3], 128
    $region9: #{tpu_custom_call.1} parent=1 // pred_fallthru
      _
    %v21 = vld [vmem:[#allocation2] sm:$0xff]
    %v22 = vunpack.c.0.s8 %v21
    %v23 = vunpack.c.1.s8 %v21
    %v24 = vunpack.c.2.s8 %v21
    %v25 = vunpack.c.3.s8 %v21
    %v26 = vand.u32 %v22, 255
    %v27 = vand.u32 %v23, 255
    %v28 = vand.u32 %v24, 255
    %v29 = vand.u32 %v25, 255
    %v30 = vcvt.s32.f32 %v26
    %v31 = vcvt.s32.f32 %v27
    %v32 = vcvt.s32.f32 %v28
    %v33 = vcvt.s32.f32 %v29
    %v34 = vmul.f32 %v30, 0.003921569
    %v35 = vmul.f32 %v31, 0.003921569
    %v36 = vmul.f32 %v32, 0.003921569
    %v37 = vmul.f32 %v33, 0.003921569
    %38 = vst [vmem:[#allocation5] sm:$0x3f] %v34
    %39 = vst [vmem:[#allocation5 + $0x8] sm:$0x3f] %v35
    %40 = vst [vmem:[#allocation5 + $0x10] sm:$0x3f] %v36
    %41 = vst [vmem:[#allocation5 + $0x18] sm:$0x3f] %v37
    // Predicated region
    $region10: #{tpu_custom_call.1} parent=1 // pred_check
      _
    $region11: #{tpu_custom_call.1} parent=1 // pred_check_branch
      %43 = sbr.rel (0) target = $region13
    $region12: #{tpu_custom_call.1} parent=1 // pred_region
      %s45 = ssub.s32 512, 512
      %46 = vsyncadd [#allocation4], %s45
      %s48 = sshll.u32 [#allocation5], 4
      %s49 = int_to_ptr.vmem [resolvable:$true] %s48
      %51 = dma.vmem_to_hbm [thread:$0]  %s49, 512, %s1, [#allocation4]
    $region13: #{tpu_custom_call.1} parent=1 // pred_fallthru
      _
    // Predicated region
    $region14: #{tpu_custom_call.1} parent=1 // pred_check
      _
    $region15: #{tpu_custom_call.1} parent=1 // pred_check_branch
      %53 = sbr.rel (0) target = $region17
    $region16: #{tpu_custom_call.1} parent=1 // pred_region
      %54 = dma.done [#allocation4], 512
    $region17: #{tpu_custom_call.1} parent=1 // pred_fallthru
      _
    %55 = vsyncpa [#allocation3], 1
    %56 = vsyncpa [#allocation4], 1

</llo_original>
